<compile_context>
chip_gen: v5e
topology: v5e:2x2
jax: 0.10.0
libtpu: 0.0.40
codegen_flags: <defaults>
</compile_context>

<pallas_src>
import jax
import jax.numpy as jnp
from jax.experimental import pallas as pl
from jax.experimental.pallas import tpu as pltpu


def _round_up(v, m):
    return ((v + m - 1) // m) * m


def _sublane(dtype):
    # Second-minor packing granularity: 8 for 32-bit, 16 for bf16, 32 for int8/fp8.
    return max(8, 32 // jnp.dtype(dtype).itemsize)


def _vmem_budget_bytes():
    cap = 64 * 2**20  # conservative fallback (v7x per-TC VMEM)
    try:
        info = pltpu.get_tpu_info()
        cap = int(getattr(info, "vmem_capacity_bytes", cap))
    except Exception:
        pass
    # ~25% headroom for compiler scratch / semaphores.
    return max(32 * 2**20, (cap * 3) // 4)


def _dynamic_router_kernel(x_ref, wl_ref, bl_ref, wr_ref, y_ref, s_ref):
    x = x_ref[...]  # (tm, Kp) in native dtype; MXU accumulates in f32.

    # Main layer N-tile: x @ W[:, j-block] + b[j-block]
    acc = jnp.dot(x, wl_ref[...], preferred_element_type=jnp.float32)
    acc = acc + bl_ref[...].astype(jnp.float32)
    y_ref[...] = acc.astype(y_ref.dtype)

    # Router score: single lane-dense 128-wide dot per row tile (only column 0 is real).
    # Its output block is revisited across j, so compute/write it exactly once.
    @pl.when(pl.program_id(1) == 0)
    def _():
        s = jnp.dot(x, wr_ref[...], preferred_element_type=jnp.float32)
        s_ref[...] = jax.nn.sigmoid(s)


def prepare_dynamic_router_params(w_layer, b_layer, w_router):
    """Pad parameters once (call at init, not per forward).

    w_layer: (H_in, H_out) — pre-transposed PyTorch weight; b_layer: (H_out,);
    w_router: (H_in, 1)."""
    H_in, H_out = w_layer.shape
    Kp = max(128, _round_up(H_in, 128))
    Np = max(128, _round_up(H_out, 128))

    if (H_in, H_out) == (Kp, Np):
        wl_p = jnp.asarray(w_layer)
    else:
        wl_p = jnp.zeros((Kp, Np), dtype=w_layer.dtype).at[:H_in, :H_out].set(w_layer)

    b32 = jnp.asarray(b_layer, dtype=jnp.float32).reshape(1, H_out)
    bl_p = b32 if H_out == Np else jnp.zeros((1, Np), jnp.float32).at[:, :H_out].set(b32)

    wr_p = jnp.zeros((Kp, 128), dtype=w_router.dtype).at[:H_in, :1].set(w_router)

    return dict(wl=wl_p, bl=bl_p, wr=wr_p, H_in=H_in, H_out=H_out)


def dynamic_router_forward_prepared(x, params, *, tm=1024, tn=None):
    """x: (..., H_in); params from prepare_dynamic_router_params.

    Returns (y, score) with shapes (..., H_out) and (..., 1); score is float32."""
    wl_p, bl_p, wr_p = params["wl"], params["bl"], params["wr"]
    H_in, H_out = params["H_in"], params["H_out"]
    Kp, Np = wl_p.shape

    *lead, last = x.shape
    assert last == H_in, f"expected last dim {H_in}, got {last}"
    x2d = x.reshape(-1, H_in)
    M = x2d.shape[0]

    x_isz = jnp.dtype(x2d.dtype).itemsize
    wl_isz = jnp.dtype(wl_p.dtype).itemsize
    wr_isz = jnp.dtype(wr_p.dtype).itemsize
    o_isz = x_isz  # y is emitted in x's dtype
    sub = _sublane(x2d.dtype)

    # --- Row tile target ----------------------------------------------------------
    # Large enough to beat the weight-streaming roofline, sublane-aligned, clamped to
    # the (padded) problem size, and split >=2 ways when M allows so both v7x
    # TensorCores stay busy (i is the only "parallel" axis).
    tm_target = max(sub, min((int(tm) // sub) * sub, _round_up(M, sub)))
    if M > sub:
        tm_target = min(tm_target, _round_up((M + 1) // 2, sub))

    # --- N tile / row tile selection under a generation-aware VMEM budget ----------
    budget = _vmem_budget_bytes()
    nb = Np // 128
    max_tn = Np if tn is None else max(128, (int(tn) // 128) * 128)
    cands = [d * 128 for d in range(nb, 0, -1) if nb % d == 0 and d * 128 <= max_tn]
    if not cands:
        cands = [128]

    chosen = None
    fallback = None
    for tn_c in cands:  # descending: largest (weight-resident) first
        # Double-buffered VMEM footprint: fixed (weights/bias) + per-row (x, y, score).
        fixed = 2 * (Kp * tn_c * wl_isz + 8 * tn_c * 4 + Kp * 128 * wr_isz)
        per_row = 2 * (Kp * x_isz + tn_c * o_isz + 128 * 4)
        avail = budget - fixed
        if avail < per_row * sub:
            continue
        tm_c = min(tm_target, (avail // per_row) // sub * sub)
        if fallback is None:
            fallback = (tn_c, tm_c)
        if tm_c >= min(tm_target, 256):
            chosen = (tn_c, tm_c)
            break
    if chosen is None:
        chosen = fallback if fallback is not None else (128, sub)
    tn_eff, tm_eff = chosen

    Mp = _round_up(M, tm_eff)

    # Skip the padding copy entirely when shapes already conform.
    if Mp == M and Kp == H_in:
        x_p = x2d
    else:
        x_p = jnp.zeros((Mp, Kp), dtype=x2d.dtype).at[:M, :H_in].set(x2d)

    grid = (Mp // tm_eff, Np // tn_eff)

    y_p, s_p = pl.pallas_call(
        _dynamic_router_kernel,
        out_shape=(
            jax.ShapeDtypeStruct((Mp, Np), x2d.dtype),
            jax.ShapeDtypeStruct((Mp, 128), jnp.float32),
        ),
        grid_spec=pltpu.PrefetchScalarGridSpec(
            num_scalar_prefetch=0,
            grid=grid,
            in_specs=[
                pl.BlockSpec((tm_eff, Kp), lambda i, j: (i, 0)),    # x rows (const over j)
                pl.BlockSpec((Kp, tn_eff), lambda i, j: (0, j)),    # layer weight N-tile
                pl.BlockSpec((1, tn_eff), lambda i, j: (0, j)),     # layer bias N-tile
                pl.BlockSpec((Kp, 128), lambda i, j: (0, 0)),       # router weight (resident)
            ],
            out_specs=[
                pl.BlockSpec((tm_eff, tn_eff), lambda i, j: (i, j)),  # y (lane-dense)
                pl.BlockSpec((tm_eff, 128), lambda i, j: (i, 0)),     # score (revisited over j)
            ],
        ),
        compiler_params=pltpu.CompilerParams(
            dimension_semantics=("parallel", "arbitrary"),
            vmem_limit_bytes=int(budget),
        ),
    )(x_p, wl_p, bl_p, wr_p)

    y = y_p if (Mp == M and Np == H_out) else y_p[:M, :H_out]
    y = y.reshape(*lead, H_out)
    score = s_p[:M, :1].reshape(*lead, 1)
    return y, score


def dynamic_router_forward(x, w_layer, b_layer, w_router, *, tm=1024, tn=None):
    """Convenience wrapper; for hot paths call prepare_dynamic_router_params once at init."""
    params = prepare_dynamic_router_params(w_layer, b_layer, w_router)
    return dynamic_router_forward_prepared(x, params, tm=tm, tn=tn)


if __name__ == "__main__":
    # Small shapes consistent with the module (wrapped layer is an nn.Linear).
    batch, seq = 2, 8
    in_features, out_features = 32, 64

    key = jax.random.PRNGKey(0)
    k_x, k_wl, k_bl, k_wr = jax.random.split(key, 4)

    x = jax.random.normal(k_x, (batch, seq, in_features), dtype=jnp.float32)
    # PyTorch stores W as (out, in); we keep the pre-transposed (in, out) layout.
    w_layer = jax.random.normal(k_wl, (in_features, out_features), dtype=jnp.float32) * 0.1
    b_layer = jax.random.normal(k_bl, (out_features,), dtype=jnp.float32) * 0.1
    w_router = jax.random.normal(k_wr, (in_features, 1), dtype=jnp.float32) * 0.1
    # TODO(synk): torch.load(router_weight_path) checkpoint loading has no in-kernel
    # equivalent; router weights are simply passed in as an array.

    params = prepare_dynamic_router_params(w_layer, b_layer, w_router)  # pad once, at init
    y, router_output = dynamic_router_forward_prepared(x, params)
    jax.block_until_ready((y, router_output))

    # Reference check in plain JAX.
    x2d = x.reshape(-1, in_features)
    y_ref = (x2d @ w_layer + b_layer).reshape(batch, seq, out_features)
    s_ref = jax.nn.sigmoid(x2d @ w_router).reshape(batch, seq, 1)
    assert y.shape == (batch, seq, out_features)
    assert router_output.shape == (batch, seq, 1)
    assert jnp.allclose(y, y_ref, atol=1e-5, rtol=1e-5)
    assert jnp.allclose(router_output.astype(jnp.float32), s_ref, atol=1e-5, rtol=1e-5)

    print("KERNEL_OK")
</pallas_src>

<mosaic_0001>
module attributes {stable_mosaic.version = 11 : i64} {
  func.func @_dynamic_router_kernel(%arg0: i32, %arg1: i32, %arg2: memref<8x128xf32, #tpu.memory_space<vmem>>, %arg3: memref<128x128xf32, #tpu.memory_space<vmem>>, %arg4: memref<1x128xf32, #tpu.memory_space<vmem>>, %arg5: memref<128x128xf32, #tpu.memory_space<vmem>>, %arg6: memref<8x128xf32, #tpu.memory_space<vmem>>, %arg7: memref<8x128xf32, #tpu.memory_space<vmem>>) attributes {dimension_semantics = [#tpu.dimension_semantics<parallel>, #tpu.dimension_semantics<arbitrary>], iteration_bounds = array<i64: 2, 1>, scalar_prefetch = 0 : i64, scratch_operands = 0 : i64, tpu.core_type = #tpu.core_type<tc>, window_params = [{transform_indices = @transform_0, window_bounds = array<i64: 8, 128>}, {transform_indices = @transform_1, window_bounds = array<i64: 128, 128>}, {transform_indices = @transform_2, window_bounds = array<i64: 1, 128>}, {pipeline_mode = #tpu.pipeline_mode<synchronous>, transform_indices = @transform_3, window_bounds = array<i64: 128, 128>}, {transform_indices = @transform_4, window_bounds = array<i64: 8, 128>}, {transform_indices = @transform_5, window_bounds = array<i64: 8, 128>}]} {
    %c0 = arith.constant 0 : index
    %c0_0 = arith.constant 0 : index
    %0 = vector.load %arg2[%c0, %c0_0] : memref<8x128xf32, #tpu.memory_space<vmem>>, vector<8x128xf32>
    %c0_1 = arith.constant 0 : index
    %c0_2 = arith.constant 0 : index
    %1 = vector.load %arg3[%c0_1, %c0_2] : memref<128x128xf32, #tpu.memory_space<vmem>>, vector<128x128xf32>
    %cst = arith.constant dense<0.000000e+00> : vector<8x128xf32>
    %2 = tpu.matmul %0, %1, %cst {dimension_numbers = #tpu.dot_dimension_numbers<[1], [0], [0], [1], [0, 0, 1, 1], [], []>} : vector<8x128xf32>, vector<128x128xf32>, vector<8x128xf32> -> vector<8x128xf32>
    %c0_3 = arith.constant 0 : index
    %c0_4 = arith.constant 0 : index
    %3 = vector.load %arg4[%c0_3, %c0_4] : memref<1x128xf32, #tpu.memory_space<vmem>>, vector<1x128xf32>
    %4 = vector.broadcast %3 : vector<1x128xf32> to vector<8x128xf32>
    %5 = arith.addf %2, %4 : vector<8x128xf32>
    %c0_5 = arith.constant 0 : index
    %c0_6 = arith.constant 0 : index
    %6 = vector.load %arg6[%c0_5, %c0_6] : memref<8x128xf32, #tpu.memory_space<vmem>>, vector<8x128xf32>
    tpu.vector_store %arg6[%c0_5, %c0_6], %5 {strides = array<i32>} : memref<8x128xf32, #tpu.memory_space<vmem>>, vector<8x128xf32>,
    %c0_i32 = arith.constant 0 : i32
    %7 = arith.cmpi eq, %arg1, %c0_i32 : i32
    %8 = arith.extui %7 : i1 to i32
    %c0_i32_7 = arith.constant 0 : i32
    %9 = arith.cmpi ne, %8, %c0_i32_7 : i32
    scf.if %9 {
      %c0_8 = arith.constant 0 : index
      %c0_9 = arith.constant 0 : index
      %10 = vector.load %arg5[%c0_8, %c0_9] : memref<128x128xf32, #tpu.memory_space<vmem>>, vector<128x128xf32>
      %cst_10 = arith.constant dense<0.000000e+00> : vector<8x128xf32>
      %11 = tpu.matmul %0, %10, %cst_10 {dimension_numbers = #tpu.dot_dimension_numbers<[1], [0], [0], [1], [0, 0, 1, 1], [], []>} : vector<8x128xf32>, vector<128x128xf32>, vector<8x128xf32> -> vector<8x128xf32>
      %12 = arith.negf %11 : vector<8x128xf32>
      %13 = math.exp %12 : vector<8x128xf32>
      %cst_11 = arith.constant 1.000000e+00 : f32
      %14 = vector.broadcast %cst_11 : f32 to vector<8x128xf32>
      %15 = arith.addf %14, %13 : vector<8x128xf32>
      %16 = arith.divf %14, %15 : vector<8x128xf32>
      %c0_12 = arith.constant 0 : index
      %c0_13 = arith.constant 0 : index
      %17 = vector.load %arg7[%c0_12, %c0_13] : memref<8x128xf32, #tpu.memory_space<vmem>>, vector<8x128xf32>
      tpu.vector_store %arg7[%c0_12, %c0_13], %16 {strides = array<i32>} : memref<8x128xf32, #tpu.memory_space<vmem>>, vector<8x128xf32>,
    } else {
    }
    return
  }
  func.func @transform_0(%arg0: i32, %arg1: i32) -> (i32, i32) {
    %c0_i32 = arith.constant 0 : i32
    %c0_i32_0 = arith.constant 0 : i32
    return %arg0, %c0_i32 : i32, i32
  }
  func.func @transform_1(%arg0: i32, %arg1: i32) -> (i32, i32) {
    %c0_i32 = arith.constant 0 : i32
    %c0_i32_0 = arith.constant 0 : i32
    return %c0_i32, %arg1 : i32, i32
  }
  func.func @transform_2(%arg0: i32, %arg1: i32) -> (i32, i32) {
    %c0_i32 = arith.constant 0 : i32
    %c0_i32_0 = arith.constant 0 : i32
    return %c0_i32, %arg1 : i32, i32
  }
  func.func @transform_3(%arg0: i32, %arg1: i32) -> (i32, i32) {
    %c0_i32 = arith.constant 0 : i32
    %c0_i32_0 = arith.constant 0 : i32
    %c0_i32_1 = arith.constant 0 : i32
    return %c0_i32, %c0_i32_0 : i32, i32
  }
  func.func @transform_4(%arg0: i32, %arg1: i32) -> (i32, i32) {
    %c0_i32 = arith.constant 0 : i32
    return %arg0, %arg1 : i32, i32
  }
  func.func @transform_5(%arg0: i32, %arg1: i32) -> (i32, i32) {
    %c0_i32 = arith.constant 0 : i32
    %c0_i32_0 = arith.constant 0 : i32
    return %arg0, %c0_i32 : i32, i32
  }
}

</mosaic_0001>

<llo_original>
// kernel: tpu_custom_call.1
$region0: #{tpu_custom_call.1}
  #allocation0 [shape = 'u32[]', space=smem, size = 0x4, offset = 0x4, fixed_abs, tag = 'smem constant byte address 0x4 - core index']
  #allocation1 [shape = 'u32[72,128]{1,0:T(1,128)}', space=vmem, size = 0x9000, scoped, tag = 'internal scratch']
  %s0 = inlined_call_operand.hbm [shape: f32[16,128], index: 0, kind: input, shape index: {}]
  %s1 = inlined_call_operand.hbm [shape: f32[128,128], index: 1, kind: input, shape index: {}]
  %s2 = inlined_call_operand.vmem [shape: f32[1,128], index: 2, kind: input, shape index: {}]
  %s3 = inlined_call_operand.hbm [shape: f32[128,128], index: 3, kind: input, shape index: {}]
  %s4 = inlined_call_operand.hbm [shape: f32[16,128], index: 4, kind: output, shape index: {0}]
  %s5 = inlined_call_operand.hbm [shape: f32[16,128], index: 5, kind: output, shape index: {1}]
  %6 = xla_tuple %s4, %s5
  %s7 = sld [smem:[#allocation0]]
  $region73: #{tpu_custom_call.1} parent=0
    _
  %s9 = ssub.s32 1, %s7
  %s10 = scalar_select 0, %s9, %s7
  $region1: #{tpu_custom_call.1} parent=0
    #allocation2 [shape = 'u8[8192]{0}', space=vmem, size = 0x2000, scoped, tag = 'input window, operand 0']
    #allocation3 [shape = 's32[2]{0}', space=sflag, size = 0x8, scoped, tag = 'scoped memory for tpu_custom_call.1']
    #allocation4 [shape = 's32[2]{0}', space=sflag, size = 0x8, scoped, tag = 'scoped memory for tpu_custom_call.1']
    #allocation5 [shape = 'u8[65536]{0}', space=vmem, size = 0x10000, scoped, tag = 'input window, operand 1, single buffered']
    #allocation6 [shape = 's32[1]{0}', space=sflag, size = 0x4, scoped, tag = 'scoped memory for tpu_custom_call.1']
    #allocation7 [shape = 'u8[65536]{0}', space=vmem, size = 0x10000, scoped, tag = 'input window, operand 3, single buffered']
    #allocation8 [shape = 'u8[8192]{0}', space=vmem, size = 0x2000, scoped, tag = 'output window, operand 0']
    #allocation9 [shape = 'u8[8192]{0}', space=vmem, size = 0x2000, scoped, tag = 'output window, operand 1']
    #allocation10 [shape = 's32[2]{0}', space=sflag, size = 0x8, scoped, tag = 'scoped memory for tpu_custom_call.1']
    %11 = vsyncpa [#allocation3], 0
    %s12 = scalar_lea.sflag [#allocation3], 1
    %13 = vsyncpa %s12, 0
    %14 = vsyncpa [#allocation6], 0
    %15 = vsyncpa [#allocation4], 0
    %s16 = scalar_lea.sflag [#allocation4], 1
    %17 = vsyncpa %s16, 0
    %18 = vsyncpa [#allocation10], 0
    %s19 = scalar_lea.sflag [#allocation10], 1
    %20 = vsyncpa %s19, 0
    loop: start=0, step=1, limit=4
    $region2: #{tpu_custom_call.1} parent=1 // loop_pre_header
      _
    $region3: #{tpu_custom_call.1} parent=1 // loop_header
      %s22 = sphi 0, %s26
      %p23 = scmp.ge.s32.totalorder %s22, 4
      %s29 = sphi 0, %s41
      %s30 = sphi 0, %s37
      %s31 = sphi 0, %s29
      %s32 = sphi 0, %s30
      %s33 = sphi 0, %s31
      %s34 = sphi 0, %s32
      %s44 = sphi 0, %s46
      %s47 = sphi 0, %s44
      %s48 = sphi 0, %s47
      %s64 = sphi 0, %s48
      %s70 = sphi 0, %s72
      %s73 = sphi 0, %s70
      %s74 = sphi 0, %s73
      %s90 = sphi 0, %s74
      %s96 = sphi 0, %s98
      %s99 = sphi 0, %s96
      %s100 = sphi 0, %s99
      %s116 = sphi 0, %s100
      %s120 = sphi 0, %s120
      %s122 = sphi 0, %s120
      %s123 = sphi 0, %s122
      %s137 = sphi 0, %s123
      %s145 = sphi 0, %s147
      %s148 = sphi 0, %s145
      %s149 = sphi 0, %s148
      %s165 = sphi 0, %s149
      %s171 = sphi 0, %s173
      %s174 = sphi 0, %s171
      %s175 = sphi 0, %s174
      %s191 = sphi 0, %s175
    $region4: #{tpu_custom_call.1} parent=1 // loop_header_branch
      %25 = sbr.rel (%p23) target = $region8
    $region5: #{tpu_custom_call.1} parent=1 // loop_body
      %s27 = ssub.s32 %s22, 1
      %s28 = ssub.s32 %s22, 2
      %s35 = sadd.s32 1, %s30
      %p36 = scmp.ge.s32.totalorder %s35, 1
      %s37 = scalar_select %p36, 0, %s35
      %s38 = sadd.s32 1, %s29
      %s39 = scalar_select %p36, %s38, %s29
      %p40 = scmp.ge.s32.totalorder %s39, 2
      %s41 = scalar_select %p40, 0, %s39
      %s42 = ssub.s32 %s29, %s41
      %p43 = scmp.eq.s32.totalorder %s42, 0
      %s45 = sadd.s32 %s44, 1
      %s46 = scalar_select %p43, %s44, %s45
      %p49 = pneg %p43
      %p50 = scmp.eq.s32.totalorder %s22, 1
      %p51 = por %p49, %p50
      %p52 = scmp.ne.s32.totalorder %s44, %s47
      %p53 = scmp.eq.s32.totalorder %s22, 0
      %p54 = por %p52, %p53
      %p55 = scmp.ne.s32.totalorder %s44, %s47
      %p56 = scmp.eq.s32.totalorder %s27, 1
      %p57 = por %p55, %p56
      %p58 = scmp.ne.s32.totalorder %s47, %s48
      %p59 = scmp.eq.s32.totalorder %s27, 0
      %p60 = por %p58, %p59
      %p61 = scmp.ne.s32.totalorder %s47, %s48
      %p62 = scmp.eq.s32.totalorder %s28, 1
      %p63 = por %p61, %p62
      %p65 = scmp.ne.s32.totalorder %s48, %s64
      %p66 = scmp.eq.s32.totalorder %s28, 0
      %p67 = por %p65, %p66
      %s68 = ssub.s32 %s30, %s37
      %p69 = scmp.eq.s32.totalorder %s68, 0
      %s71 = sadd.s32 %s70, 1
      %s72 = scalar_select %p69, %s70, %s71
      %p75 = pneg %p69
      %p76 = scmp.eq.s32.totalorder %s22, 1
      %p77 = por %p75, %p76
      %p78 = scmp.ne.s32.totalorder %s70, %s73
      %p79 = scmp.eq.s32.totalorder %s22, 0
      %p80 = por %p78, %p79
      %p81 = scmp.ne.s32.totalorder %s70, %s73
      %p82 = scmp.eq.s32.totalorder %s27, 1
      %p83 = por %p81, %p82
      %p84 = scmp.ne.s32.totalorder %s73, %s74
      %p85 = scmp.eq.s32.totalorder %s27, 0
      %p86 = por %p84, %p85
      %p87 = scmp.ne.s32.totalorder %s73, %s74
      %p88 = scmp.eq.s32.totalorder %s28, 1
      %p89 = por %p87, %p88
      %p91 = scmp.ne.s32.totalorder %s74, %s90
      %p92 = scmp.eq.s32.totalorder %s28, 0
      %p93 = por %p91, %p92
      %s94 = ssub.s32 %s30, %s37
      %p95 = scmp.eq.s32.totalorder %s94, 0
      %s97 = sadd.s32 %s96, 1
      %s98 = scalar_select %p95, %s96, %s97
      %p101 = pneg %p95
      %p102 = scmp.eq.s32.totalorder %s22, 1
      %p103 = por %p101, %p102
      %p104 = scmp.ne.s32.totalorder %s96, %s99
      %p105 = scmp.eq.s32.totalorder %s22, 0
      %p106 = por %p104, %p105
      %p107 = scmp.ne.s32.totalorder %s96, %s99
      %p108 = scmp.eq.s32.totalorder %s27, 1
      %p109 = por %p107, %p108
      %p110 = scmp.ne.s32.totalorder %s99, %s100
      %p111 = scmp.eq.s32.totalorder %s27, 0
      %p112 = por %p110, %p111
      %p113 = scmp.ne.s32.totalorder %s99, %s100
      %p114 = scmp.eq.s32.totalorder %s28, 1
      %p115 = por %p113, %p114
      %p117 = scmp.ne.s32.totalorder %s100, %s116
      %p118 = scmp.eq.s32.totalorder %s28, 0
      %p119 = por %p117, %p118
      %s121 = sadd.s32 %s120, 1
      %p124 = scmp.eq.s32.totalorder %s22, 1
      %p125 = scmp.ne.s32.totalorder %s120, %s122
      %p126 = scmp.eq.s32.totalorder %s22, 0
      %p127 = por %p125, %p126
      %p128 = scmp.ne.s32.totalorder %s120, %s122
      %p129 = scmp.eq.s32.totalorder %s27, 1
      %p130 = por %p128, %p129
      %p131 = scmp.ne.s32.totalorder %s122, %s123
      %p132 = scmp.eq.s32.totalorder %s27, 0
      %p133 = por %p131, %p132
      %p134 = scmp.ne.s32.totalorder %s122, %s123
      %p135 = scmp.eq.s32.totalorder %s28, 1
      %p136 = por %p134, %p135
      %p138 = scmp.ne.s32.totalorder %s123, %s137
      %p139 = scmp.eq.s32.totalorder %s28, 0
      %p140 = por %p138, %p139
      %s141 = ssub.s32 %s29, %s41
      %s142 = ssub.s32 %s30, %s37
      %s143 = sor.u32 %s141, %s142
      %p144 = scmp.eq.s32.totalorder %s143, 0
      %s146 = sadd.s32 %s145, 1
      %s147 = scalar_select %p144, %s145, %s146
      %p150 = pneg %p144
      %p151 = scmp.eq.s32.totalorder %s22, 1
      %p152 = por %p150, %p151
      %p153 = scmp.ne.s32.totalorder %s145, %s148
      %p154 = scmp.eq.s32.totalorder %s22, 0
      %p155 = por %p153, %p154
      %p156 = scmp.ne.s32.totalorder %s145, %s148
      %p157 = scmp.eq.s32.totalorder %s27, 1
      %p158 = por %p156, %p157
      %p159 = scmp.ne.s32.totalorder %s148, %s149
      %p160 = scmp.eq.s32.totalorder %s27, 0
      %p161 = por %p159, %p160
      %p162 = scmp.ne.s32.totalorder %s148, %s149
      %p163 = scmp.eq.s32.totalorder %s28, 1
      %p164 = por %p162, %p163
      %p166 = scmp.ne.s32.totalorder %s149, %s165
      %p167 = scmp.eq.s32.totalorder %s28, 0
      %p168 = por %p166, %p167
      %s169 = ssub.s32 %s29, %s41
      %p170 = scmp.eq.s32.totalorder %s169, 0
      %s172 = sadd.s32 %s171, 1
      %s173 = scalar_select %p170, %s171, %s172
      %p176 = pneg %p170
      %p177 = scmp.eq.s32.totalorder %s22, 1
      %p178 = por %p176, %p177
      %p179 = scmp.ne.s32.totalorder %s171, %s174
      %p180 = scmp.eq.s32.totalorder %s22, 0
      %p181 = por %p179, %p180
      %p182 = scmp.ne.s32.totalorder %s171, %s174
      %p183 = scmp.eq.s32.totalorder %s27, 1
      %p184 = por %p182, %p183
      %p185 = scmp.ne.s32.totalorder %s174, %s175
      %p186 = scmp.eq.s32.totalorder %s27, 0
      %p187 = por %p185, %p186
      %p188 = scmp.ne.s32.totalorder %s174, %s175
      %p189 = scmp.eq.s32.totalorder %s28, 1
      %p190 = por %p188, %p189
      %p192 = scmp.ne.s32.totalorder %s175, %s191
      %p193 = scmp.eq.s32.totalorder %s28, 0
      %p194 = por %p192, %p193
      %p195 = scmp.le.s32.totalorder 1, %s22
      %p196 = scmp.lt.s32.totalorder %s22, 3
      %p197 = pnand %p195, %p196
      %p198 = pneg %p197
      // Predicated region
      $region9: #{tpu_custom_call.1} parent=5 // pred_check
        _
      $region10: #{tpu_custom_call.1} parent=5 // pred_check_branch
        %200 = sbr.rel (%p197) target = $region12
      $region11: #{tpu_custom_call.1} parent=5 // pred_region
        %s201 = ssub.s32 %s22, 1
        // Predicated region
        $region13: #{tpu_custom_call.1} parent=11 // pred_check
          %p202 = pneg %p86
        $region14: #{tpu_custom_call.1} parent=11 // pred_check_branch
          %204 = sbr.rel (%p202) target = $region16
        $region15: #{tpu_custom_call.1} parent=11 // pred_region
          %206 = vsyncadd [#allocation6], 0
          %s207 = smul.addr %s32, 8
          %s208 = scalar_lea.hbm %s1, %s207
          %s209 = sshll.u32 %s208, 4
          %s210 = int_to_ptr.hbm [resolvable:$true] %s209
          %s211 = sshll.u32 [#allocation5], 4
          %s212 = int_to_ptr.vmem [resolvable:$true] %s211
          %217 = dma.hbm_to_vmem [thread:$0]  %s210, 2048, %s212, [#allocation6], 128, 128, 8
        $region16: #{tpu_custom_call.1} parent=11 // pred_fallthru
          _
        // Predicated region
        $region17: #{tpu_custom_call.1} parent=11 // pred_check
          %p218 = pneg %p112
        $region18: #{tpu_custom_call.1} parent=11 // pred_check_branch
          %220 = sbr.rel (%p218) target = $region20
        $region19: #{tpu_custom_call.1} parent=11 // pred_region
          %p221 = scmp.lt.s32.totalorder %s32, 0
          %s222 = scalar_select %p221, %s32, 0
          %s223 = scalar_lea.vmem %s2, %s222
        $region20: #{tpu_custom_call.1} parent=11 // pred_fallthru
          _
        // Predicated region
        $region21: #{tpu_custom_call.1} parent=11 // pred_check
          %p224 = pneg %p133
        $region22: #{tpu_custom_call.1} parent=11 // pred_check_branch
          %226 = sbr.rel (%p224) target = $region24
        $region23: #{tpu_custom_call.1} parent=11 // pred_region
          %228 = vsyncadd [#allocation6], 0
          %s229 = sshll.u32 %s3, 4
          %s230 = int_to_ptr.hbm [resolvable:$true] %s229
          %s231 = sshll.u32 [#allocation7], 4
          %s232 = int_to_ptr.vmem [resolvable:$true] %s231
          %237 = dma.hbm_to_vmem [thread:$0]  %s230, 2048, %s232, [#allocation6], 128, 128, 8
        $region24: #{tpu_custom_call.1} parent=11 // pred_fallthru
          _
      $region12: #{tpu_custom_call.1} parent=5 // pred_fallthru
        _
      %p238 = scmp.lt.s32.totalorder %s22, 2
      // Predicated region
      $region25: #{tpu_custom_call.1} parent=5 // pred_check
        %p239 = pneg %p238
      $region26: #{tpu_custom_call.1} parent=5 // pred_check_branch
        %241 = sbr.rel (%p239) target = $region28
      $region27: #{tpu_custom_call.1} parent=5 // pred_region
        // Predicated region
        $region29: #{tpu_custom_call.1} parent=27 // pred_check
          %p242 = pneg %p54
        $region30: #{tpu_custom_call.1} parent=27 // pred_check_branch
          %244 = sbr.rel (%p242) target = $region32
        $region31: #{tpu_custom_call.1} parent=27 // pred_region
          %s245 = sand.u32 %s44, 1
          %s246 = scalar_lea.sflag [#allocation3], %s245
          %s247 = sand.u32 %s44, 1
          %s248 = smul.addr %s247, 8
          %s249 = scalar_lea.vmem [#allocation2], %s248
          %251 = vsyncadd %s246, 0
          %s252 = smul.addr %s29, 8
          %s253 = scalar_lea.hbm %s0, %s252
          %s255 = sshll.u32 %s253, 4
          %s256 = int_to_ptr.hbm [resolvable:$true] %s255
          %s257 = sshll.u32 %s249, 4
          %s258 = int_to_ptr.vmem [resolvable:$true] %s257
          %260 = dma.hbm_to_vmem [thread:$0]  %s256, 128, %s258, %s246
        $region32: #{tpu_custom_call.1} parent=27 // pred_fallthru
          _
      $region28: #{tpu_custom_call.1} parent=5 // pred_fallthru
        _
      %p261 = scmp.le.s32.totalorder 1, %s22
      %p262 = scmp.lt.s32.totalorder %s22, 3
      %p263 = pnand %p261, %p262
      %p264 = pneg %p263
      // Predicated region
      $region33: #{tpu_custom_call.1} parent=5 // pred_check
        _
      $region34: #{tpu_custom_call.1} parent=5 // pred_check_branch
        %266 = sbr.rel (%p263) target = $region36
      $region35: #{tpu_custom_call.1} parent=5 // pred_region
        %s267 = ssub.s32 %s22, 1
        %s268 = sand.u32 %s47, 1
        %s269 = scalar_lea.sflag [#allocation3], %s268
        %s270 = sand.u32 %s47, 1
        %s271 = smul.addr %s270, 8
        %s272 = scalar_lea.vmem [#allocation2], %s271
        // Predicated region
        $region37: #{tpu_custom_call.1} parent=35 // pred_check
          %p273 = pneg %p60
        $region38: #{tpu_custom_call.1} parent=35 // pred_check_branch
          %275 = sbr.rel (%p273) target = $region40
        $region39: #{tpu_custom_call.1} parent=35 // pred_region
          %277 = dma.done %s269, 128
        $region40: #{tpu_custom_call.1} parent=35 // pred_fallthru
          _
        // Predicated region
        $region41: #{tpu_custom_call.1} parent=35 // pred_check
          %p278 = pneg %p86
        $region42: #{tpu_custom_call.1} parent=35 // pred_check_branch
          %280 = sbr.rel (%p278) target = $region44
        $region43: #{tpu_custom_call.1} parent=35 // pred_region
          %282 = dma.done [#allocation6], 2048
        $region44: #{tpu_custom_call.1} parent=35 // pred_fallthru
          _
        // Predicated region
        $region45: #{tpu_custom_call.1} parent=35 // pred_check
          %p283 = pneg %p133
        $region46: #{tpu_custom_call.1} parent=35 // pred_check_branch
          %285 = sbr.rel (%p283) target = $region48
        $region47: #{tpu_custom_call.1} parent=35 // pred_region
          %287 = dma.done [#allocation6], 2048
        $region48: #{tpu_custom_call.1} parent=35 // pred_fallthru
          _
        %s288 = sand.u32 %s47, 1
        %s289 = scalar_lea.sflag [#allocation3], %s288
        %s290 = sand.u32 %s47, 1
        %s291 = smul.addr %s290, 8
        %s292 = scalar_lea.vmem [#allocation2], %s291
        %p293 = pneg %p60
        %p294 = pneg %p57
        %p295 = pneg %p86
        %p296 = pneg %p83
        %p297 = scmp.lt.s32.totalorder %s32, 0
        %s298 = scalar_select %p297, %s32, 0
        %s299 = scalar_lea.vmem %s2, %s298
        %p300 = pneg %p112
        %p301 = pneg %p109
        %p302 = pneg %p133
        %p303 = pneg %p130
        %p304 = pneg %p161
        %p305 = pneg %p158
        %s306 = sand.u32 %s148, 1
        %s307 = scalar_lea.sflag [#allocation4], %s306
        %s308 = sand.u32 %s148, 1
        %s309 = smul.addr %s308, 8
        %s310 = scalar_lea.vmem [#allocation8], %s309
        %p311 = pneg %p187
        %p312 = pneg %p184
        %s313 = sand.u32 %s174, 1
        %s314 = scalar_lea.sflag [#allocation10], %s313
        %s315 = sand.u32 %s174, 1
        %s316 = smul.addr %s315, 8
        %s317 = scalar_lea.vmem [#allocation9], %s316
        %p318 = scmp.lt.s32.totalorder %s32, 0
        %s319 = scalar_select %p318, %s32, 0
        %s320 = scalar_lea.vmem %s2, %s319
        %v321 = vld [vmem:[%s272] sm:$0xff]
        %v322 = vld [vmem:[#allocation5] sm:$0xff]
        %v323 = vld [vmem:[#allocation5 + $0x8] sm:$0xff]
        %v324 = vld [vmem:[#allocation5 + $0x10] sm:$0xff]
        %v325 = vld [vmem:[#allocation5 + $0x18] sm:$0xff]
        %v326 = vld [vmem:[#allocation5 + $0x20] sm:$0xff]
        %v327 = vld [vmem:[#allocation5 + $0x28] sm:$0xff]
        %v328 = vld [vmem:[#allocation5 + $0x30] sm:$0xff]
        %v329 = vld [vmem:[#allocation5 + $0x38] sm:$0xff]
        %v330 = vld [vmem:[#allocation5 + $0x40] sm:$0xff]
        %v331 = vld [vmem:[#allocation5 + $0x48] sm:$0xff]
        %v332 = vld [vmem:[#allocation5 + $0x50] sm:$0xff]
        %v333 = vld [vmem:[#allocation5 + $0x58] sm:$0xff]
        %v334 = vld [vmem:[#allocation5 + $0x60] sm:$0xff]
        %v335 = vld [vmem:[#allocation5 + $0x68] sm:$0xff]
        %v336 = vld [vmem:[#allocation5 + $0x70] sm:$0xff]
        %v337 = vld [vmem:[#allocation5 + $0x78] sm:$0xff]
        %v338 = vld [vmem:[%s320] sm:$0x1]
        %v340 = vperm.slane %v338, 0
        %342 = vmatpush.msra.mxu0 %v337
        %343 = vmatpush.msra.mxu0 %v336
        %344 = vmatpush.msra.mxu0 %v335
        %345 = vmatpush.msra.mxu0 %v334
        %346 = vmatpush.msra.mxu0 %v333
        %347 = vmatpush.msra.mxu0 %v332
        %348 = vmatpush.msra.mxu0 %v331
        %349 = vmatpush.msra.mxu0 %v330
        %350 = vmatpush.msra.mxu0 %v329
        %351 = vmatpush.msra.mxu0 %v328
        %352 = vmatpush.msra.mxu0 %v327
        %353 = vmatpush.msra.mxu0 %v326
        %354 = vmatpush.msra.mxu0 %v325
        %355 = vmatpush.msra.mxu0 %v324
        %356 = vmatpush.msra.mxu0 %v323
        %357 = vmatpush.msra.mxu0 %v322
        %358 = vmatmul.f32.gmra.mxu0 %v321
        %v359 = vpop.f32.mrf.mxu0
        %v360 = vadd.f32 %v340, %v359
        %361 = vdwg.mxu0
        %362 = vst [vmem:[%s310] sm:$0xff] %v360
        %p363 = scmp.eq.s32.totalorder %s32, 0
        // Predicated region
        $region49: #{tpu_custom_call.1} parent=35 // pred_check
          %p364 = pneg %p363
        $region50: #{tpu_custom_call.1} parent=35 // pred_check_branch
          %366 = sbr.rel (%p364) target = $region52
        $region51: #{tpu_custom_call.1} parent=35 // pred_region
          %v367 = vld [vmem:[#allocation7] sm:$0xff]
          %v368 = vld [vmem:[#allocation7 + $0x8] sm:$0xff]
          %v369 = vld [vmem:[#allocation7 + $0x10] sm:$0xff]
          %v370 = vld [vmem:[#allocation7 + $0x18] sm:$0xff]
          %v371 = vld [vmem:[#allocation7 + $0x20] sm:$0xff]
          %v372 = vld [vmem:[#allocation7 + $0x28] sm:$0xff]
          %v373 = vld [vmem:[#allocation7 + $0x30] sm:$0xff]
          %v374 = vld [vmem:[#allocation7 + $0x38] sm:$0xff]
          %v375 = vld [vmem:[#allocation7 + $0x40] sm:$0xff]
          %v376 = vld [vmem:[#allocation7 + $0x48] sm:$0xff]
          %v377 = vld [vmem:[#allocation7 + $0x50] sm:$0xff]
          %v378 = vld [vmem:[#allocation7 + $0x58] sm:$0xff]
          %v379 = vld [vmem:[#allocation7 + $0x60] sm:$0xff]
          %v380 = vld [vmem:[#allocation7 + $0x68] sm:$0xff]
          %v381 = vld [vmem:[#allocation7 + $0x70] sm:$0xff]
          %v382 = vld [vmem:[#allocation7 + $0x78] sm:$0xff]
          %383 = vmatpush.msra.mxu0 %v382
          %384 = vmatpush.msra.mxu0 %v381
          %385 = vmatpush.msra.mxu0 %v380
          %386 = vmatpush.msra.mxu0 %v379
          %387 = vmatpush.msra.mxu0 %v378
          %388 = vmatpush.msra.mxu0 %v377
          %389 = vmatpush.msra.mxu0 %v376
          %390 = vmatpush.msra.mxu0 %v375
          %391 = vmatpush.msra.mxu0 %v374
          %392 = vmatpush.msra.mxu0 %v373
          %393 = vmatpush.msra.mxu0 %v372
          %394 = vmatpush.msra.mxu0 %v371
          %395 = vmatpush.msra.mxu0 %v370
          %396 = vmatpush.msra.mxu0 %v369
          %397 = vmatpush.msra.mxu0 %v368
          %398 = vmatpush.msra.mxu0 %v367
          %399 = vmatmul.f32.gmra.mxu0 %v321
          %v400 = vpop.f32.mrf.mxu0
          %v401 = vadd.f32 0.0, %v400
          %402 = vdwg.mxu0
          %v403 = vxor.u32 %v401, 2147483648
          %v404 = vmul.f32 %v403, 1.442695
          %v405 = vpow.pop %v404
          %v406 = vadd.f32 %v405, 1.0
          %v407 = vrcp.pop %v406
          %v408 = vmul.f32 %v406, %v407
          %v409 = vsub.f32 1.0, %v408
          %v410 = vmul.f32 %v407, %v409
          %v411 = vadd.f32 %v407, %v410
          %vm412 = vweird.f32 %v406
          %vm413 = vweird.f32 %v407
          %vm414 = vmor %vm412, %vm413
          %v415 = vsel %vm414, %v407, %v411
          %v416 = vand.u32 2147483647, %v406
          %vm417 = vcmp.eq.f32.partialorder %v416, 8.507059e+37
          %v418 = vand.u32 %v406, 2147483648
          %v419 = vor.u32 1.1754944e-38, %v418
          %v420 = vsel %vm417, %v419, %v415
          %v421 = vmul.f32 1.0, %v420
          %422 = vst [vmem:[%s317] sm:$0xff] %v421
        $region52: #{tpu_custom_call.1} parent=35 // pred_fallthru
          _
        %s423 = sand.u32 %s148, 1
        %s424 = scalar_lea.sflag [#allocation4], %s423
        %s425 = sand.u32 %s148, 1
        %s426 = smul.addr %s425, 8
        %s427 = scalar_lea.vmem [#allocation8], %s426
        %s428 = sand.u32 %s174, 1
        %s429 = scalar_lea.sflag [#allocation10], %s428
        %s430 = sand.u32 %s174, 1
        %s431 = smul.addr %s430, 8
        %s432 = scalar_lea.vmem [#allocation9], %s431
        // Predicated region
        $region53: #{tpu_custom_call.1} parent=35 // pred_check
          %p433 = pneg %p158
        $region54: #{tpu_custom_call.1} parent=35 // pred_check_branch
          %435 = sbr.rel (%p433) target = $region56
        $region55: #{tpu_custom_call.1} parent=35 // pred_region
          %437 = vsyncadd %s424, 0
          %s438 = sadd.s32 %s32, %s31
          %s439 = smul.addr %s438, 8
          %s440 = scalar_lea.hbm %s4, %s439
          %s442 = sshll.u32 %s427, 4
          %s443 = int_to_ptr.vmem [resolvable:$true] %s442
          %s444 = sshll.u32 %s440, 4
          %s445 = int_to_ptr.hbm [resolvable:$true] %s444
          %447 = dma.vmem_to_hbm [thread:$0]  %s443, 128, %s445, %s424
        $region56: #{tpu_custom_call.1} parent=35 // pred_fallthru
          _
        // Predicated region
        $region57: #{tpu_custom_call.1} parent=35 // pred_check
          %p448 = pneg %p184
        $region58: #{tpu_custom_call.1} parent=35 // pred_check_branch
          %450 = sbr.rel (%p448) target = $region60
        $region59: #{tpu_custom_call.1} parent=35 // pred_region
          %452 = vsyncadd %s429, 0
          %s453 = smul.addr %s31, 8
          %s454 = scalar_lea.hbm %s5, %s453
          %s456 = sshll.u32 %s432, 4
          %s457 = int_to_ptr.vmem [resolvable:$true] %s456
          %s458 = sshll.u32 %s454, 4
          %s459 = int_to_ptr.hbm [resolvable:$true] %s458
          %461 = dma.vmem_to_hbm [thread:$0]  %s457, 128, %s459, %s429
        $region60: #{tpu_custom_call.1} parent=35 // pred_fallthru
          _
      $region36: #{tpu_custom_call.1} parent=5 // pred_fallthru
        _
      %p462 = scmp.le.s32.totalorder 2, %s22
      // Predicated region
      $region61: #{tpu_custom_call.1} parent=5 // pred_check
        %p463 = pneg %p462
      $region62: #{tpu_custom_call.1} parent=5 // pred_check_branch
        %465 = sbr.rel (%p463) target = $region64
      $region63: #{tpu_custom_call.1} parent=5 // pred_region
        %s466 = ssub.s32 %s22, 2
        // Predicated region
        $region65: #{tpu_custom_call.1} parent=63 // pred_check
          %p467 = pneg %p164
        $region66: #{tpu_custom_call.1} parent=63 // pred_check_branch
          %469 = sbr.rel (%p467) target = $region68
        $region67: #{tpu_custom_call.1} parent=63 // pred_region
          %s470 = sand.u32 %s149, 1
          %s471 = scalar_lea.sflag [#allocation4], %s470
          %s472 = sand.u32 %s149, 1
          %s473 = smul.addr %s472, 8
          %s474 = scalar_lea.vmem [#allocation8], %s473
          %476 = dma.done %s471, 128
        $region68: #{tpu_custom_call.1} parent=63 // pred_fallthru
          _
        // Predicated region
        $region69: #{tpu_custom_call.1} parent=63 // pred_check
          %p477 = pneg %p190
        $region70: #{tpu_custom_call.1} parent=63 // pred_check_branch
          %479 = sbr.rel (%p477) target = $region72
        $region71: #{tpu_custom_call.1} parent=63 // pred_region
          %s480 = sand.u32 %s175, 1
          %s481 = scalar_lea.sflag [#allocation10], %s480
          %s482 = sand.u32 %s175, 1
          %s483 = smul.addr %s482, 8
          %s484 = scalar_lea.vmem [#allocation9], %s483
          %486 = dma.done %s481, 128
        $region72: #{tpu_custom_call.1} parent=63 // pred_fallthru
          _
      $region64: #{tpu_custom_call.1} parent=5 // pred_fallthru
        _
    $region6: #{tpu_custom_call.1} parent=1 // loop_footer
      %s26 = sadd.s32 1, %s22
    $region7: #{tpu_custom_call.1} parent=1 // loop_footer_branch
      %21 = sbr.rel target = $region3
    $region8: #{tpu_custom_call.1} parent=1 // loop_exit
      _
    %487 = vsyncpa [#allocation3], 1
    %s488 = scalar_lea.sflag [#allocation3], 1
    %489 = vsyncpa %s488, 1
    %490 = vsyncpa [#allocation6], 1
    %491 = vsyncpa [#allocation4], 1
    %s492 = scalar_lea.sflag [#allocation4], 1
    %493 = vsyncpa %s492, 1
    %494 = vsyncpa [#allocation10], 1
    %s495 = scalar_lea.sflag [#allocation10], 1
    %496 = vsyncpa %s495, 1

</llo_original>
